<compile_context>
chip_gen: v5e
topology: v5e:2x2
jax: 0.10.0
libtpu: 0.0.40
codegen_flags: <defaults>
</compile_context>

<pallas_src>
import functools

import jax
import jax.numpy as jnp
from jax.experimental import pallas as pl
from jax.experimental.pallas import tpu as pltpu


_VMEM_BUDGET = 12 * 1024 * 1024   # per-step data footprint target (v7x-safe)


def _shortcut_kernel(x_ref, sel_ref, o_ref, acc_ref, *, bn, c_in, c_out, pad,
                     gather_dtype, precision):
    """One grid step processes `bn` whole images.

    x_ref:   (bn * c_in,  H * W)         flattened NCHW rows of bn input images
    sel_ref: (H * W,      Hout * Wout)   resident one-hot spatial subsample matrix
    o_ref:   (bn * c_out, Hout * Wout)   flattened NCHW rows of bn output images
    acc_ref: (bn * c_in,  Hout * Wout)   f32 scratch holding the gathered block
    """
    hw_out = o_ref.shape[-1]

    # Single fused one-hot gather matmul for the whole block (M = bn*c_in).
    # Exact: bf16 path (one-hot, f32 accumulate) or f32 path with HIGHEST.
    lhs = x_ref[...].astype(gather_dtype)
    acc_ref[...] = jnp.dot(lhs, sel_ref[...],
                           preferred_element_type=jnp.float32,
                           precision=precision)

    zeros = jnp.zeros((pad, hw_out), dtype=o_ref.dtype) if pad else None

    # Channel zero-padding is pure data movement: zero-fill the pad rows and
    # copy the gathered rows at a static sublane offset.  Offsets are static
    # (compile-time aligned) and each iteration only touches (c_in, hw_out)
    # values staged in VMEM, so the static unroll cannot blow the vreg file.
    for i in range(bn):
        ob = i * c_out
        if pad:
            o_ref[pl.ds(ob, pad), :] = zeros
            o_ref[pl.ds(ob + pad + c_in, pad), :] = zeros
        o_ref[pl.ds(ob + pad, c_in), :] = (
            acc_ref[pl.ds(i * c_in, c_in), :].astype(o_ref.dtype))


def _pick_batch_tile(n, c_in, c_out, hw, hw_out, itemsize, sel_bytes):
    """Images per grid step (bn).

    Picks the largest divisor of n such that
      * block sublane dims (bn*c_in, bn*c_out) are legal (multiple of 8 or the
        full array dim),
      * double-buffered in/out blocks + f32 scratch + 2x sel stay under a
        budget that fits every generation (incl. v7x's 64 MiB VMEM per TC),
      * the grid keeps >= min(n, 4) steps so "parallel" can shard the batch
        axis over v7x's 2 TensorCores and DMA pipelining stays active.
    """
    def rows_ok(rows, total_rows):
        return rows % 8 == 0 or rows == total_rows

    per_image = (2 * (c_in * hw + c_out * hw_out) * itemsize   # dbl-buffered blocks
                 + c_in * hw_out * 4)                          # f32 gather scratch
    budget = max(_VMEM_BUDGET - 2 * sel_bytes, per_image)      # sel double-buffered
    min_grid = min(n, 4)

    valid = [b for b in range(1, min(n, 64) + 1)
             if n % b == 0
             and rows_ok(b * c_in, n * c_in)
             and rows_ok(b * c_out, n * c_out)]
    if not valid:
        return n                                  # single full block: always legal
    fitting = [b for b in valid if b * per_image <= budget] or valid[:1]
    preferred = [b for b in fitting if n // b >= min_grid]
    return max(preferred or fitting)


def lambda_layer_shortcut(x_nchw, planes):
    """Pallas TPU implementation of the ResNet option-A LambdaLayer shortcut.

    x_nchw: (N, C_in, H, W) -> (N, C_in + 2*(planes//4), ceil(H/2), ceil(W/2)),
    equal to F.pad(x[:, :, ::2, ::2], (0, 0, 0, 0, planes//4, planes//4)).
    """
    n, c_in, h, w = x_nchw.shape
    pad = planes // 4
    c_out = c_in + 2 * pad
    h_out, w_out = -(-h // 2), -(-w // 2)
    hw, hw_out = h * w, h_out * w_out

    # Free (contiguous) reshape: rows = (image, channel), cols = flat spatial.
    x2 = x_nchw.reshape(n * c_in, hw)

    # Gather dtype / precision: bf16 sel for bf16 activations (exact, half the
    # resident VMEM, 1 MXU pass); f32 sel + HIGHEST precision for f32 so the
    # one-hot gather is bit-exact (no bf16 truncation of the activations).
    if x_nchw.dtype == jnp.bfloat16:
        gather_dtype, precision = jnp.bfloat16, None
    else:
        gather_dtype, precision = jnp.float32, jax.lax.Precision.HIGHEST

    # One-hot spatial-subsample matrix: sel[(2*ho)*W + 2*wo, ho*Wout + wo] = 1.
    # Built once per call (tiny for CIFAR-scale maps), resident in VMEM
    # (constant index_map -> fetched once, reused every grid step).
    src = ((2 * jnp.arange(h_out))[:, None] * w
           + (2 * jnp.arange(w_out))[None, :]).reshape(-1)              # (hw_out,)
    sel = (jnp.arange(hw)[:, None] == src[None, :]).astype(gather_dtype)  # (hw, hw_out)
    sel_bytes = hw * hw_out * jnp.dtype(gather_dtype).itemsize

    bn = _pick_batch_tile(n, c_in, c_out, hw, hw_out,
                          x_nchw.dtype.itemsize, sel_bytes)
    grid = (n // bn,)

    kernel = functools.partial(
        _shortcut_kernel, bn=bn, c_in=c_in, c_out=c_out, pad=pad,
        gather_dtype=gather_dtype, precision=precision)

    out2 = pl.pallas_call(
        kernel,
        out_shape=jax.ShapeDtypeStruct((n * c_out, hw_out), x_nchw.dtype),
        grid_spec=pltpu.PrefetchScalarGridSpec(
            num_scalar_prefetch=0,
            grid=grid,
            in_specs=[
                # bn images' worth of (C_in, H*W) rows per step (lane-dense).
                pl.BlockSpec((bn * c_in, hw), lambda i: (i, 0)),
                # Selection matrix: same block every step -> stays resident.
                pl.BlockSpec((hw, hw_out), lambda i: (0, 0)),
            ],
            out_specs=pl.BlockSpec((bn * c_out, hw_out), lambda i: (i, 0)),
            scratch_shapes=[pltpu.VMEM((bn * c_in, hw_out), jnp.float32)],
        ),
        compiler_params=pltpu.CompilerParams(
            # Batch axis is fully independent -> shardable across v7x's 2 TCs.
            dimension_semantics=("parallel",),
            # Room for the larger tiles; safe on v5e/v6e (128 MiB) and v7x (64 MiB).
            vmem_limit_bytes=32 * 1024 * 1024,
        ),
    )(x2, sel)

    # Free reshape back to NCHW.
    return out2.reshape(n, c_out, h_out, w_out)


if __name__ == "__main__":
    key = jax.random.PRNGKey(0)
    n, c_in, h, w = 2, 16, 16, 16
    planes = 32                      # option-A shortcut: 16 -> 32 channels
    pad = planes // 4

    x = jax.random.normal(key, (n, c_in, h, w), dtype=jnp.float32)

    out = jax.jit(functools.partial(lambda_layer_shortcut, planes=planes))(x)
    out = jax.block_until_ready(out)

    # Pure-JAX reference of the PyTorch lambda:
    #   F.pad(x[:, :, ::2, ::2], (0, 0, 0, 0, pad, pad))
    ref = jnp.pad(x[:, :, ::2, ::2], ((0, 0), (pad, pad), (0, 0), (0, 0)))

    assert out.shape == ref.shape, (out.shape, ref.shape)
    assert out.shape == (n, planes, h // 2, w // 2), out.shape
    assert out.dtype == x.dtype, out.dtype
    assert jnp.allclose(out, ref), float(jnp.abs(out - ref).max())
    print("KERNEL_OK")
</pallas_src>

<mosaic_0001>
module attributes {stable_mosaic.version = 11 : i64} {
  func.func @_shortcut_kernel(%arg0: i32, %arg1: memref<16x256xf32, #tpu.memory_space<vmem>>, %arg2: memref<256x64xf32, #tpu.memory_space<vmem>>, %arg3: memref<32x64xf32, #tpu.memory_space<vmem>>, %arg4: memref<16x64xf32, #tpu.memory_space<vmem>>) attributes {dimension_semantics = [#tpu.dimension_semantics<parallel>], iteration_bounds = array<i64: 2>, scalar_prefetch = 0 : i64, scratch_operands = 1 : i64, tpu.core_type = #tpu.core_type<tc>, window_params = [{transform_indices = @transform_0, window_bounds = array<i64: 16, 256>}, {pipeline_mode = #tpu.pipeline_mode<synchronous>, transform_indices = @transform_1, window_bounds = array<i64: 256, 64>}, {transform_indices = @transform_2, window_bounds = array<i64: 32, 64>}]} {
    %c0 = arith.constant 0 : index
    %c0_0 = arith.constant 0 : index
    %0 = vector.load %arg1[%c0, %c0_0] : memref<16x256xf32, #tpu.memory_space<vmem>>, vector<16x256xf32>
    %c0_1 = arith.constant 0 : index
    %c0_2 = arith.constant 0 : index
    %1 = vector.load %arg2[%c0_1, %c0_2] : memref<256x64xf32, #tpu.memory_space<vmem>>, vector<256x64xf32>
    %cst = arith.constant dense<0.000000e+00> : vector<16x64xf32>
    %2 = tpu.matmul %0, %1, %cst {dimension_numbers = #tpu.dot_dimension_numbers<[1], [0], [0], [1], [0, 0, 1, 1], [], []>, precision = #tpu.contract_precision<fp32>} : vector<16x256xf32>, vector<256x64xf32>, vector<16x64xf32> -> vector<16x64xf32>
    %c0_3 = arith.constant 0 : index
    %c0_4 = arith.constant 0 : index
    %3 = vector.load %arg4[%c0_3, %c0_4] : memref<16x64xf32, #tpu.memory_space<vmem>>, vector<16x64xf32>
    tpu.vector_store %arg4[%c0_3, %c0_4], %2 {strides = array<i32>} : memref<16x64xf32, #tpu.memory_space<vmem>>, vector<16x64xf32>,
    %cst_5 = arith.constant 0.000000e+00 : f32
    %4 = vector.broadcast %cst_5 : f32 to vector<8x64xf32>
    %c0_6 = arith.constant 0 : index
    %c0_7 = arith.constant 0 : index
    %5 = vector.load %arg3[%c0_6, %c0_7] : memref<32x64xf32, #tpu.memory_space<vmem>>, vector<8x64xf32>
    tpu.vector_store %arg3[%c0_6, %c0_7], %4 {strides = array<i32>} : memref<32x64xf32, #tpu.memory_space<vmem>>, vector<8x64xf32>,
    %c24 = arith.constant 24 : index
    %c0_8 = arith.constant 0 : index
    %6 = vector.load %arg3[%c24, %c0_8] : memref<32x64xf32, #tpu.memory_space<vmem>>, vector<8x64xf32>
    tpu.vector_store %arg3[%c24, %c0_8], %4 {strides = array<i32>} : memref<32x64xf32, #tpu.memory_space<vmem>>, vector<8x64xf32>,
    %c0_9 = arith.constant 0 : index
    %c0_10 = arith.constant 0 : index
    %7 = vector.load %arg4[%c0_9, %c0_10] : memref<16x64xf32, #tpu.memory_space<vmem>>, vector<16x64xf32>
    %c8 = arith.constant 8 : index
    %c0_11 = arith.constant 0 : index
    %8 = vector.load %arg3[%c8, %c0_11] : memref<32x64xf32, #tpu.memory_space<vmem>>, vector<16x64xf32>
    tpu.vector_store %arg3[%c8, %c0_11], %7 {strides = array<i32>} : memref<32x64xf32, #tpu.memory_space<vmem>>, vector<16x64xf32>,
    return
  }
  func.func @transform_0(%arg0: i32) -> (i32, i32) {
    %c0_i32 = arith.constant 0 : i32
    %c0_i32_0 = arith.constant 0 : i32
    return %arg0, %c0_i32 : i32, i32
  }
  func.func @transform_1(%arg0: i32) -> (i32, i32) {
    %c0_i32 = arith.constant 0 : i32
    %c0_i32_0 = arith.constant 0 : i32
    %c0_i32_1 = arith.constant 0 : i32
    return %c0_i32, %c0_i32_0 : i32, i32
  }
  func.func @transform_2(%arg0: i32) -> (i32, i32) {
    %c0_i32 = arith.constant 0 : i32
    %c0_i32_0 = arith.constant 0 : i32
    return %arg0, %c0_i32 : i32, i32
  }
}

</mosaic_0001>

<llo_original>
// kernel: lambda_layer_shortcut.1
$region0: #{lambda_layer_shortcut.1}
  #allocation0 [shape = 'u32[]', space=smem, size = 0x4, offset = 0x4, fixed_abs, tag = 'smem constant byte address 0x4 - core index']
  #allocation1 [shape = 'u32[72,128]{1,0:T(1,128)}', space=vmem, size = 0x9000, scoped, tag = 'internal scratch']
  #allocation2 [shape = 'f32[16,64]{1,0:T(8,128)}', space=vmem, size = 0x2000, scoped, tag = 'scratch operand']
  %s0 = inlined_call_operand.vmem [shape: f32[32,256], index: 0, kind: input, shape index: {}]
  %s1 = inlined_call_operand.vmem [shape: f32[256,64], index: 1, kind: input, shape index: {}]
  %s2 = inlined_call_operand.vmem [shape: f32[64,64], index: 2, kind: output, shape index: {}]
  %s3 = sld [smem:[#allocation0]]
  $region41: #{lambda_layer_shortcut.1} parent=0
    _
  %s5 = ssub.s32 1, %s3
  %s6 = scalar_select 0, %s5, %s3
  loop: start=0, step=1, limit=4
  $region2: #{lambda_layer_shortcut.1} parent=0 // loop_pre_header
    _
  $region3: #{lambda_layer_shortcut.1} parent=0 // loop_header
    %s8 = sphi 0, %s12
    %p9 = scmp.ge.s32.totalorder %s8, 4
    %s18 = sphi 0, %s20
    %s21 = sphi 0, %s18
    %s22 = sphi 0, %s21
    %s38 = sphi 0, %s22
    %s42 = sphi 0, %s42
    %s44 = sphi 0, %s42
    %s45 = sphi 0, %s44
    %s59 = sphi 0, %s45
    %s65 = sphi 0, %s67
    %s68 = sphi 0, %s65
    %s69 = sphi 0, %s68
    %s85 = sphi 0, %s69
  $region4: #{lambda_layer_shortcut.1} parent=0 // loop_header_branch
    %11 = sbr.rel (%p9) target = $region8
  $region5: #{lambda_layer_shortcut.1} parent=0 // loop_body
    %s13 = ssub.s32 %s8, 1
    %s14 = ssub.s32 %s8, 2
    %s15 = sadd.s32 %s8, 1
    %s16 = ssub.s32 %s8, %s15
    %p17 = scmp.eq.s32.totalorder %s16, 0
    %s19 = sadd.s32 %s18, 1
    %s20 = scalar_select %p17, %s18, %s19
    %p23 = pneg %p17
    %p24 = scmp.eq.s32.totalorder %s8, 1
    %p25 = por %p23, %p24
    %p26 = scmp.ne.s32.totalorder %s18, %s21
    %p27 = scmp.eq.s32.totalorder %s8, 0
    %p28 = por %p26, %p27
    %p29 = scmp.ne.s32.totalorder %s18, %s21
    %p30 = scmp.eq.s32.totalorder %s13, 1
    %p31 = por %p29, %p30
    %p32 = scmp.ne.s32.totalorder %s21, %s22
    %p33 = scmp.eq.s32.totalorder %s13, 0
    %p34 = por %p32, %p33
    %p35 = scmp.ne.s32.totalorder %s21, %s22
    %p36 = scmp.eq.s32.totalorder %s14, 1
    %p37 = por %p35, %p36
    %p39 = scmp.ne.s32.totalorder %s22, %s38
    %p40 = scmp.eq.s32.totalorder %s14, 0
    %p41 = por %p39, %p40
    %s43 = sadd.s32 %s42, 1
    %p46 = scmp.eq.s32.totalorder %s8, 1
    %p47 = scmp.ne.s32.totalorder %s42, %s44
    %p48 = scmp.eq.s32.totalorder %s8, 0
    %p49 = por %p47, %p48
    %p50 = scmp.ne.s32.totalorder %s42, %s44
    %p51 = scmp.eq.s32.totalorder %s13, 1
    %p52 = por %p50, %p51
    %p53 = scmp.ne.s32.totalorder %s44, %s45
    %p54 = scmp.eq.s32.totalorder %s13, 0
    %p55 = por %p53, %p54
    %p56 = scmp.ne.s32.totalorder %s44, %s45
    %p57 = scmp.eq.s32.totalorder %s14, 1
    %p58 = por %p56, %p57
    %p60 = scmp.ne.s32.totalorder %s45, %s59
    %p61 = scmp.eq.s32.totalorder %s14, 0
    %p62 = por %p60, %p61
    %s63 = ssub.s32 %s8, %s15
    %p64 = scmp.eq.s32.totalorder %s63, 0
    %s66 = sadd.s32 %s65, 1
    %s67 = scalar_select %p64, %s65, %s66
    %p70 = pneg %p64
    %p71 = scmp.eq.s32.totalorder %s8, 1
    %p72 = por %p70, %p71
    %p73 = scmp.ne.s32.totalorder %s65, %s68
    %p74 = scmp.eq.s32.totalorder %s8, 0
    %p75 = por %p73, %p74
    %p76 = scmp.ne.s32.totalorder %s65, %s68
    %p77 = scmp.eq.s32.totalorder %s13, 1
    %p78 = por %p76, %p77
    %p79 = scmp.ne.s32.totalorder %s68, %s69
    %p80 = scmp.eq.s32.totalorder %s13, 0
    %p81 = por %p79, %p80
    %p82 = scmp.ne.s32.totalorder %s68, %s69
    %p83 = scmp.eq.s32.totalorder %s14, 1
    %p84 = por %p82, %p83
    %p86 = scmp.ne.s32.totalorder %s69, %s85
    %p87 = scmp.eq.s32.totalorder %s14, 0
    %p88 = por %p86, %p87
    %p89 = scmp.le.s32.totalorder 1, %s8
    %p90 = scmp.lt.s32.totalorder %s8, 3
    %p91 = pnand %p89, %p90
    %p92 = pneg %p91
    // Predicated region
    $region9: #{lambda_layer_shortcut.1} parent=5 // pred_check
      _
    $region10: #{lambda_layer_shortcut.1} parent=5 // pred_check_branch
      %94 = sbr.rel (%p91) target = $region12
    $region11: #{lambda_layer_shortcut.1} parent=5 // pred_region
      %s95 = ssub.s32 %s8, 1
      // Predicated region
      $region13: #{lambda_layer_shortcut.1} parent=11 // pred_check
        %p96 = pneg %p55
      $region14: #{lambda_layer_shortcut.1} parent=11 // pred_check_branch
        %98 = sbr.rel (%p96) target = $region16
      $region15: #{lambda_layer_shortcut.1} parent=11 // pred_region
        _
      $region16: #{lambda_layer_shortcut.1} parent=11 // pred_fallthru
        _
    $region12: #{lambda_layer_shortcut.1} parent=5 // pred_fallthru
      _
    %p99 = scmp.lt.s32.totalorder %s8, 2
    // Predicated region
    $region17: #{lambda_layer_shortcut.1} parent=5 // pred_check
      %p100 = pneg %p99
    $region18: #{lambda_layer_shortcut.1} parent=5 // pred_check_branch
      %102 = sbr.rel (%p100) target = $region20
    $region19: #{lambda_layer_shortcut.1} parent=5 // pred_region
      // Predicated region
      $region21: #{lambda_layer_shortcut.1} parent=19 // pred_check
        %p103 = pneg %p28
      $region22: #{lambda_layer_shortcut.1} parent=19 // pred_check_branch
        %105 = sbr.rel (%p103) target = $region24
      $region23: #{lambda_layer_shortcut.1} parent=19 // pred_region
        %s106 = smul.u32 2, %s8
        %p107 = scmp.lt.s32.totalorder %s106, 3
        %s108 = scalar_select %p107, %s106, 3
        %s109 = smul.addr %s108, 2
        %s110 = smul.addr %s109, 8
        %s111 = scalar_lea.vmem %s0, %s110
        %s112 = smul.u32 2, %s8
      $region24: #{lambda_layer_shortcut.1} parent=19 // pred_fallthru
        _
    $region20: #{lambda_layer_shortcut.1} parent=5 // pred_fallthru
      _
    %p113 = scmp.le.s32.totalorder 1, %s8
    %p114 = scmp.lt.s32.totalorder %s8, 3
    %p115 = pnand %p113, %p114
    %p116 = pneg %p115
    // Predicated region
    $region25: #{lambda_layer_shortcut.1} parent=5 // pred_check
      _
    $region26: #{lambda_layer_shortcut.1} parent=5 // pred_check_branch
      %118 = sbr.rel (%p115) target = $region28
    $region27: #{lambda_layer_shortcut.1} parent=5 // pred_region
      %s119 = ssub.s32 %s8, 1
      %s120 = smul.u32 2, %s13
      %p121 = scmp.lt.s32.totalorder %s120, 3
      %s122 = scalar_select %p121, %s120, 3
      %s123 = smul.addr %s122, 2
      %s124 = smul.addr %s123, 8
      %s125 = scalar_lea.vmem %s0, %s124
      %p126 = pneg %p34
      %p127 = pneg %p31
      %p128 = pneg %p55
      %p129 = pneg %p52
      %p130 = pneg %p81
      %p131 = pneg %p78
      %s132 = smul.u32 4, %s13
      %p133 = scmp.lt.s32.totalorder %s132, 7
      %s134 = scalar_select %p133, %s132, 7
      %s135 = smul.addr %s134, 8
      %s136 = scalar_lea.vmem %s2, %s135
      %s137 = smul.u32 2, %s13
      %p138 = scmp.lt.s32.totalorder %s137, 3
      %s139 = scalar_select %p138, %s137, 3
      %s140 = smul.addr %s139, 2
      %s141 = smul.addr %s140, 8
      %s142 = scalar_lea.vmem %s0, %s141
      %s143 = smul.u32 2, %s13
      %s144 = smul.u32 4, %s13
      %p145 = scmp.lt.s32.totalorder %s144, 7
      %s146 = scalar_select %p145, %s144, 7
      %s147 = smul.addr %s146, 8
      %s148 = scalar_lea.vmem %s2, %s147
      %s149 = smul.u32 4, %s13
      %v150 = vld [vmem:[%s142] sm:$0xff]
      %v151 = vld [vmem:[%s142 + $0x8] sm:$0xff]
      %v152 = vld [vmem:[%s142 + $0x10] sm:$0xff]
      %v153 = vld [vmem:[%s142 + $0x18] sm:$0xff]
      %v154 = vld [vmem:[%s1] sm:$0xff]
      %v155 = vld [vmem:[%s1 + $0x8] sm:$0xff]
      %v156 = vld [vmem:[%s1 + $0x10] sm:$0xff]
      %v157 = vld [vmem:[%s1 + $0x18] sm:$0xff]
      %v158 = vld [vmem:[%s1 + $0x20] sm:$0xff]
      %v159 = vld [vmem:[%s1 + $0x28] sm:$0xff]
      %v160 = vld [vmem:[%s1 + $0x30] sm:$0xff]
      %v161 = vld [vmem:[%s1 + $0x38] sm:$0xff]
      %v162 = vld [vmem:[%s1 + $0x40] sm:$0xff]
      %v163 = vld [vmem:[%s1 + $0x48] sm:$0xff]
      %v164 = vld [vmem:[%s1 + $0x50] sm:$0xff]
      %v165 = vld [vmem:[%s1 + $0x58] sm:$0xff]
      %v166 = vld [vmem:[%s1 + $0x60] sm:$0xff]
      %v167 = vld [vmem:[%s1 + $0x68] sm:$0xff]
      %v168 = vld [vmem:[%s1 + $0x70] sm:$0xff]
      %v169 = vld [vmem:[%s1 + $0x78] sm:$0xff]
      %v170 = vld [vmem:[%s1 + $0x80] sm:$0xff]
      %v171 = vld [vmem:[%s1 + $0x88] sm:$0xff]
      %v172 = vld [vmem:[%s1 + $0x90] sm:$0xff]
      %v173 = vld [vmem:[%s1 + $0x98] sm:$0xff]
      %v174 = vld [vmem:[%s1 + $0xa0] sm:$0xff]
      %v175 = vld [vmem:[%s1 + $0xa8] sm:$0xff]
      %v176 = vld [vmem:[%s1 + $0xb0] sm:$0xff]
      %v177 = vld [vmem:[%s1 + $0xb8] sm:$0xff]
      %v178 = vld [vmem:[%s1 + $0xc0] sm:$0xff]
      %v179 = vld [vmem:[%s1 + $0xc8] sm:$0xff]
      %v180 = vld [vmem:[%s1 + $0xd0] sm:$0xff]
      %v181 = vld [vmem:[%s1 + $0xd8] sm:$0xff]
      %v182 = vld [vmem:[%s1 + $0xe0] sm:$0xff]
      %v183 = vld [vmem:[%s1 + $0xe8] sm:$0xff]
      %v184 = vld [vmem:[%s1 + $0xf0] sm:$0xff]
      %v185 = vld [vmem:[%s1 + $0xf8] sm:$0xff]
      %v186 = vand.u32 %v169, 4294901760
      %187 = vmatpush.msra.mxu0 %v186
      %v188 = vand.u32 %v168, 4294901760
      %189 = vmatpush.msra.mxu0 %v188
      %v190 = vand.u32 %v167, 4294901760
      %191 = vmatpush.msra.mxu0 %v190
      %v192 = vand.u32 %v166, 4294901760
      %193 = vmatpush.msra.mxu0 %v192
      %v194 = vand.u32 %v165, 4294901760
      %195 = vmatpush.msra.mxu0 %v194
      %v196 = vand.u32 %v164, 4294901760
      %197 = vmatpush.msra.mxu0 %v196
      %v198 = vand.u32 %v163, 4294901760
      %199 = vmatpush.msra.mxu0 %v198
      %v200 = vand.u32 %v162, 4294901760
      %201 = vmatpush.msra.mxu0 %v200
      %v202 = vand.u32 %v161, 4294901760
      %203 = vmatpush.msra.mxu0 %v202
      %v204 = vand.u32 %v160, 4294901760
      %205 = vmatpush.msra.mxu0 %v204
      %v206 = vand.u32 %v159, 4294901760
      %207 = vmatpush.msra.mxu0 %v206
      %v208 = vand.u32 %v158, 4294901760
      %209 = vmatpush.msra.mxu0 %v208
      %v210 = vand.u32 %v157, 4294901760
      %211 = vmatpush.msra.mxu0 %v210
      %v212 = vand.u32 %v156, 4294901760
      %213 = vmatpush.msra.mxu0 %v212
      %v214 = vand.u32 %v155, 4294901760
      %215 = vmatpush.msra.mxu0 %v214
      %v216 = vand.u32 %v154, 4294901760
      %217 = vmatpush.msra.mxu0 %v216
      %v218 = vand.u32 %v150, 4294901760
      %v219 = vsub.f32 %v150, %v218
      %v220 = vand.u32 %v219, 4294901760
      %v221 = vsub.f32 %v219, %v220
      %v222 = vand.u32 %v221, 4294901760
      %223 = vmatmul.f32.gmra.mxu0 %v222
      %v224 = vpop.f32.mrf.mxu0
      %v225 = vadd.f32 0.0, %v224
      %v226 = vand.u32 %v152, 4294901760
      %v227 = vsub.f32 %v152, %v226
      %v228 = vand.u32 %v227, 4294901760
      %v229 = vsub.f32 %v227, %v228
      %v230 = vand.u32 %v229, 4294901760
      %231 = vmatmul.f32.gmra.mxu0 %v230
      %v232 = vpop.f32.mrf.mxu0
      %v233 = vadd.f32 0.0, %v232
      %234 = vdwg.mxu0
      %v235 = vand.u32 %v169, 4294901760
      %v236 = vsub.f32 %v169, %v235
      %v237 = vand.u32 %v236, 4294901760
      %v238 = vsub.f32 %v236, %v237
      %v239 = vand.u32 %v238, 4294901760
      %240 = vmatpush.msra.mxu0 %v239
      %v241 = vand.u32 %v168, 4294901760
      %v242 = vsub.f32 %v168, %v241
      %v243 = vand.u32 %v242, 4294901760
      %v244 = vsub.f32 %v242, %v243
      %v245 = vand.u32 %v244, 4294901760
      %246 = vmatpush.msra.mxu0 %v245
      %v247 = vand.u32 %v167, 4294901760
      %v248 = vsub.f32 %v167, %v247
      %v249 = vand.u32 %v248, 4294901760
      %v250 = vsub.f32 %v248, %v249
      %v251 = vand.u32 %v250, 4294901760
      %252 = vmatpush.msra.mxu0 %v251
      %v253 = vand.u32 %v166, 4294901760
      %v254 = vsub.f32 %v166, %v253
      %v255 = vand.u32 %v254, 4294901760
      %v256 = vsub.f32 %v254, %v255
      %v257 = vand.u32 %v256, 4294901760
      %258 = vmatpush.msra.mxu0 %v257
      %v259 = vand.u32 %v165, 4294901760
      %v260 = vsub.f32 %v165, %v259
      %v261 = vand.u32 %v260, 4294901760
      %v262 = vsub.f32 %v260, %v261
      %v263 = vand.u32 %v262, 4294901760
      %264 = vmatpush.msra.mxu0 %v263
      %v265 = vand.u32 %v164, 4294901760
      %v266 = vsub.f32 %v164, %v265
      %v267 = vand.u32 %v266, 4294901760
      %v268 = vsub.f32 %v266, %v267
      %v269 = vand.u32 %v268, 4294901760
      %270 = vmatpush.msra.mxu0 %v269
      %v271 = vand.u32 %v163, 4294901760
      %v272 = vsub.f32 %v163, %v271
      %v273 = vand.u32 %v272, 4294901760
      %v274 = vsub.f32 %v272, %v273
      %v275 = vand.u32 %v274, 4294901760
      %276 = vmatpush.msra.mxu0 %v275
      %v277 = vand.u32 %v162, 4294901760
      %v278 = vsub.f32 %v162, %v277
      %v279 = vand.u32 %v278, 4294901760
      %v280 = vsub.f32 %v278, %v279
      %v281 = vand.u32 %v280, 4294901760
      %282 = vmatpush.msra.mxu0 %v281
      %v283 = vand.u32 %v161, 4294901760
      %v284 = vsub.f32 %v161, %v283
      %v285 = vand.u32 %v284, 4294901760
      %v286 = vsub.f32 %v284, %v285
      %v287 = vand.u32 %v286, 4294901760
      %288 = vmatpush.msra.mxu0 %v287
      %v289 = vand.u32 %v160, 4294901760
      %v290 = vsub.f32 %v160, %v289
      %v291 = vand.u32 %v290, 4294901760
      %v292 = vsub.f32 %v290, %v291
      %v293 = vand.u32 %v292, 4294901760
      %294 = vmatpush.msra.mxu0 %v293
      %v295 = vand.u32 %v159, 4294901760
      %v296 = vsub.f32 %v159, %v295
      %v297 = vand.u32 %v296, 4294901760
      %v298 = vsub.f32 %v296, %v297
      %v299 = vand.u32 %v298, 4294901760
      %300 = vmatpush.msra.mxu0 %v299
      %v301 = vand.u32 %v158, 4294901760
      %v302 = vsub.f32 %v158, %v301
      %v303 = vand.u32 %v302, 4294901760
      %v304 = vsub.f32 %v302, %v303
      %v305 = vand.u32 %v304, 4294901760
      %306 = vmatpush.msra.mxu0 %v305
      %v307 = vand.u32 %v157, 4294901760
      %v308 = vsub.f32 %v157, %v307
      %v309 = vand.u32 %v308, 4294901760
      %v310 = vsub.f32 %v308, %v309
      %v311 = vand.u32 %v310, 4294901760
      %312 = vmatpush.msra.mxu0 %v311
      %v313 = vand.u32 %v156, 4294901760
      %v314 = vsub.f32 %v156, %v313
      %v315 = vand.u32 %v314, 4294901760
      %v316 = vsub.f32 %v314, %v315
      %v317 = vand.u32 %v316, 4294901760
      %318 = vmatpush.msra.mxu0 %v317
      %v319 = vand.u32 %v155, 4294901760
      %v320 = vsub.f32 %v155, %v319
      %v321 = vand.u32 %v320, 4294901760
      %v322 = vsub.f32 %v320, %v321
      %v323 = vand.u32 %v322, 4294901760
      %324 = vmatpush.msra.mxu0 %v323
      %v325 = vand.u32 %v154, 4294901760
      %v326 = vsub.f32 %v154, %v325
      %v327 = vand.u32 %v326, 4294901760
      %v328 = vsub.f32 %v326, %v327
      %v329 = vand.u32 %v328, 4294901760
      %330 = vmatpush.msra.mxu0 %v329
      %v331 = vand.u32 %v150, 4294901760
      %332 = vmatmul.f32.gmra.mxu0 %v331
      %v333 = vpop.f32.mrf.mxu0
      %v334 = vadd.f32 %v225, %v333
      %v335 = vand.u32 %v152, 4294901760
      %336 = vmatmul.f32.gmra.mxu0 %v335
      %v337 = vpop.f32.mrf.mxu0
      %v338 = vadd.f32 %v233, %v337
      %339 = vdwg.mxu0
      %v340 = vand.u32 %v169, 4294901760
      %v341 = vsub.f32 %v169, %v340
      %342 = vmatpush.msra.mxu0 %v341
      %v343 = vand.u32 %v168, 4294901760
      %v344 = vsub.f32 %v168, %v343
      %345 = vmatpush.msra.mxu0 %v344
      %v346 = vand.u32 %v167, 4294901760
      %v347 = vsub.f32 %v167, %v346
      %348 = vmatpush.msra.mxu0 %v347
      %v349 = vand.u32 %v166, 4294901760
      %v350 = vsub.f32 %v166, %v349
      %351 = vmatpush.msra.mxu0 %v350
      %v352 = vand.u32 %v165, 4294901760
      %v353 = vsub.f32 %v165, %v352
      %354 = vmatpush.msra.mxu0 %v353
      %v355 = vand.u32 %v164, 4294901760
      %v356 = vsub.f32 %v164, %v355
      %357 = vmatpush.msra.mxu0 %v356
      %v358 = vand.u32 %v163, 4294901760
      %v359 = vsub.f32 %v163, %v358
      %360 = vmatpush.msra.mxu0 %v359
      %v361 = vand.u32 %v162, 4294901760
      %v362 = vsub.f32 %v162, %v361
      %363 = vmatpush.msra.mxu0 %v362
      %v364 = vand.u32 %v161, 4294901760
      %v365 = vsub.f32 %v161, %v364
      %366 = vmatpush.msra.mxu0 %v365
      %v367 = vand.u32 %v160, 4294901760
      %v368 = vsub.f32 %v160, %v367
      %369 = vmatpush.msra.mxu0 %v368
      %v370 = vand.u32 %v159, 4294901760
      %v371 = vsub.f32 %v159, %v370
      %372 = vmatpush.msra.mxu0 %v371
      %v373 = vand.u32 %v158, 4294901760
      %v374 = vsub.f32 %v158, %v373
      %375 = vmatpush.msra.mxu0 %v374
      %v376 = vand.u32 %v157, 4294901760
      %v377 = vsub.f32 %v157, %v376
      %378 = vmatpush.msra.mxu0 %v377
      %v379 = vand.u32 %v156, 4294901760
      %v380 = vsub.f32 %v156, %v379
      %381 = vmatpush.msra.mxu0 %v380
      %v382 = vand.u32 %v155, 4294901760
      %v383 = vsub.f32 %v155, %v382
      %384 = vmatpush.msra.mxu0 %v383
      %v385 = vand.u32 %v154, 4294901760
      %v386 = vsub.f32 %v154, %v385
      %387 = vmatpush.msra.mxu0 %v386
      %v388 = vand.u32 %v150, 4294901760
      %v389 = vsub.f32 %v150, %v388
      %390 = vmatmul.f32.gmra.mxu0 %v389
      %v391 = vpop.f32.mrf.mxu0
      %v392 = vadd.f32 %v334, %v391
      %v393 = vand.u32 %v152, 4294901760
      %v394 = vsub.f32 %v152, %v393
      %395 = vmatmul.f32.gmra.mxu0 %v394
      %v396 = vpop.f32.mrf.mxu0
      %v397 = vadd.f32 %v338, %v396
      %398 = vdwg.mxu0
      %v399 = vand.u32 %v169, 4294901760
      %400 = vmatpush.msra.mxu0 %v399
      %v401 = vand.u32 %v168, 4294901760
      %402 = vmatpush.msra.mxu0 %v401
      %v403 = vand.u32 %v167, 4294901760
      %404 = vmatpush.msra.mxu0 %v403
      %v405 = vand.u32 %v166, 4294901760
      %406 = vmatpush.msra.mxu0 %v405
      %v407 = vand.u32 %v165, 4294901760
      %408 = vmatpush.msra.mxu0 %v407
      %v409 = vand.u32 %v164, 4294901760
      %410 = vmatpush.msra.mxu0 %v409
      %v411 = vand.u32 %v163, 4294901760
      %412 = vmatpush.msra.mxu0 %v411
      %v413 = vand.u32 %v162, 4294901760
      %414 = vmatpush.msra.mxu0 %v413
      %v415 = vand.u32 %v161, 4294901760
      %416 = vmatpush.msra.mxu0 %v415
      %v417 = vand.u32 %v160, 4294901760
      %418 = vmatpush.msra.mxu0 %v417
      %v419 = vand.u32 %v159, 4294901760
      %420 = vmatpush.msra.mxu0 %v419
      %v421 = vand.u32 %v158, 4294901760
      %422 = vmatpush.msra.mxu0 %v421
      %v423 = vand.u32 %v157, 4294901760
      %424 = vmatpush.msra.mxu0 %v423
      %v425 = vand.u32 %v156, 4294901760
      %426 = vmatpush.msra.mxu0 %v425
      %v427 = vand.u32 %v155, 4294901760
      %428 = vmatpush.msra.mxu0 %v427
      %v429 = vand.u32 %v154, 4294901760
      %430 = vmatpush.msra.mxu0 %v429
      %v431 = vand.u32 %v150, 4294901760
      %v432 = vsub.f32 %v150, %v431
      %v433 = vand.u32 %v432, 4294901760
      %434 = vmatmul.f32.gmra.mxu0 %v433
      %v435 = vpop.f32.mrf.mxu0
      %v436 = vadd.f32 %v392, %v435
      %v437 = vand.u32 %v152, 4294901760
      %v438 = vsub.f32 %v152, %v437
      %v439 = vand.u32 %v438, 4294901760
      %440 = vmatmul.f32.gmra.mxu0 %v439
      %v441 = vpop.f32.mrf.mxu0
      %v442 = vadd.f32 %v397, %v441
      %443 = vdwg.mxu0
      %v444 = vand.u32 %v169, 4294901760
      %v445 = vsub.f32 %v169, %v444
      %v446 = vand.u32 %v445, 4294901760
      %447 = vmatpush.msra.mxu0 %v446
      %v448 = vand.u32 %v168, 4294901760
      %v449 = vsub.f32 %v168, %v448
      %v450 = vand.u32 %v449, 4294901760
      %451 = vmatpush.msra.mxu0 %v450
      %v452 = vand.u32 %v167, 4294901760
      %v453 = vsub.f32 %v167, %v452
      %v454 = vand.u32 %v453, 4294901760
      %455 = vmatpush.msra.mxu0 %v454
      %v456 = vand.u32 %v166, 4294901760
      %v457 = vsub.f32 %v166, %v456
      %v458 = vand.u32 %v457, 4294901760
      %459 = vmatpush.msra.mxu0 %v458
      %v460 = vand.u32 %v165, 4294901760
      %v461 = vsub.f32 %v165, %v460
      %v462 = vand.u32 %v461, 4294901760
      %463 = vmatpush.msra.mxu0 %v462
      %v464 = vand.u32 %v164, 4294901760
      %v465 = vsub.f32 %v164, %v464
      %v466 = vand.u32 %v465, 4294901760
      %467 = vmatpush.msra.mxu0 %v466
      %v468 = vand.u32 %v163, 4294901760
      %v469 = vsub.f32 %v163, %v468
      %v470 = vand.u32 %v469, 4294901760
      %471 = vmatpush.msra.mxu0 %v470
      %v472 = vand.u32 %v162, 4294901760
      %v473 = vsub.f32 %v162, %v472
      %v474 = vand.u32 %v473, 4294901760
      %475 = vmatpush.msra.mxu0 %v474
      %v476 = vand.u32 %v161, 4294901760
      %v477 = vsub.f32 %v161, %v476
      %v478 = vand.u32 %v477, 4294901760
      %479 = vmatpush.msra.mxu0 %v478
      %v480 = vand.u32 %v160, 4294901760
      %v481 = vsub.f32 %v160, %v480
      %v482 = vand.u32 %v481, 4294901760
      %483 = vmatpush.msra.mxu0 %v482
      %v484 = vand.u32 %v159, 4294901760
      %v485 = vsub.f32 %v159, %v484
      %v486 = vand.u32 %v485, 4294901760
      %487 = vmatpush.msra.mxu0 %v486
      %v488 = vand.u32 %v158, 4294901760
      %v489 = vsub.f32 %v158, %v488
      %v490 = vand.u32 %v489, 4294901760
      %491 = vmatpush.msra.mxu0 %v490
      %v492 = vand.u32 %v157, 4294901760
      %v493 = vsub.f32 %v157, %v492
      %v494 = vand.u32 %v493, 4294901760
      %495 = vmatpush.msra.mxu0 %v494
      %v496 = vand.u32 %v156, 4294901760
      %v497 = vsub.f32 %v156, %v496
      %v498 = vand.u32 %v497, 4294901760
      %499 = vmatpush.msra.mxu0 %v498
      %v500 = vand.u32 %v155, 4294901760
      %v501 = vsub.f32 %v155, %v500
      %v502 = vand.u32 %v501, 4294901760
      %503 = vmatpush.msra.mxu0 %v502
      %v504 = vand.u32 %v154, 4294901760
      %v505 = vsub.f32 %v154, %v504
      %v506 = vand.u32 %v505, 4294901760
      %507 = vmatpush.msra.mxu0 %v506
      %v508 = vand.u32 %v150, 4294901760
      %509 = vmatmul.f32.gmra.mxu0 %v508
      %v510 = vpop.f32.mrf.mxu0
      %v511 = vadd.f32 %v436, %v510
      %v512 = vand.u32 %v152, 4294901760
      %513 = vmatmul.f32.gmra.mxu0 %v512
      %v514 = vpop.f32.mrf.mxu0
      %v515 = vadd.f32 %v442, %v514
      %516 = vdwg.mxu0
      %v517 = vand.u32 %v169, 4294901760
      %518 = vmatpush.msra.mxu0 %v517
      %v519 = vand.u32 %v168, 4294901760
      %520 = vmatpush.msra.mxu0 %v519
      %v521 = vand.u32 %v167, 4294901760
      %522 = vmatpush.msra.mxu0 %v521
      %v523 = vand.u32 %v166, 4294901760
      %524 = vmatpush.msra.mxu0 %v523
      %v525 = vand.u32 %v165, 4294901760
      %526 = vmatpush.msra.mxu0 %v525
      %v527 = vand.u32 %v164, 4294901760
      %528 = vmatpush.msra.mxu0 %v527
      %v529 = vand.u32 %v163, 4294901760
      %530 = vmatpush.msra.mxu0 %v529
      %v531 = vand.u32 %v162, 4294901760
      %532 = vmatpush.msra.mxu0 %v531
      %v533 = vand.u32 %v161, 4294901760
      %534 = vmatpush.msra.mxu0 %v533
      %v535 = vand.u32 %v160, 4294901760
      %536 = vmatpush.msra.mxu0 %v535
      %v537 = vand.u32 %v159, 4294901760
      %538 = vmatpush.msra.mxu0 %v537
      %v539 = vand.u32 %v158, 4294901760
      %540 = vmatpush.msra.mxu0 %v539
      %v541 = vand.u32 %v157, 4294901760
      %542 = vmatpush.msra.mxu0 %v541
      %v543 = vand.u32 %v156, 4294901760
      %544 = vmatpush.msra.mxu0 %v543
      %v545 = vand.u32 %v155, 4294901760
      %546 = vmatpush.msra.mxu0 %v545
      %v547 = vand.u32 %v154, 4294901760
      %548 = vmatpush.msra.mxu0 %v547
      %v549 = vand.u32 %v150, 4294901760
      %550 = vmatmul.f32.gmra.mxu0 %v549
      %v551 = vpop.f32.mrf.mxu0
      %v552 = vadd.f32 %v511, %v551
      %v553 = vand.u32 %v152, 4294901760
      %554 = vmatmul.f32.gmra.mxu0 %v553
      %v555 = vpop.f32.mrf.mxu0
      %v556 = vadd.f32 %v515, %v555
      %557 = vdwg.mxu0
      %v558 = vand.u32 %v185, 4294901760
      %559 = vmatpush.msra.mxu0 %v558
      %v560 = vand.u32 %v184, 4294901760
      %561 = vmatpush.msra.mxu0 %v560
      %v562 = vand.u32 %v183, 4294901760
      %563 = vmatpush.msra.mxu0 %v562
      %v564 = vand.u32 %v182, 4294901760
      %565 = vmatpush.msra.mxu0 %v564
      %v566 = vand.u32 %v181, 4294901760
      %567 = vmatpush.msra.mxu0 %v566
      %v568 = vand.u32 %v180, 4294901760
      %569 = vmatpush.msra.mxu0 %v568
      %v570 = vand.u32 %v179, 4294901760
      %571 = vmatpush.msra.mxu0 %v570
      %v572 = vand.u32 %v178, 4294901760
      %573 = vmatpush.msra.mxu0 %v572
      %v574 = vand.u32 %v177, 4294901760
      %575 = vmatpush.msra.mxu0 %v574
      %v576 = vand.u32 %v176, 4294901760
      %577 = vmatpush.msra.mxu0 %v576
      %v578 = vand.u32 %v175, 4294901760
      %579 = vmatpush.msra.mxu0 %v578
      %v580 = vand.u32 %v174, 4294901760
      %581 = vmatpush.msra.mxu0 %v580
      %v582 = vand.u32 %v173, 4294901760
      %583 = vmatpush.msra.mxu0 %v582
      %v584 = vand.u32 %v172, 4294901760
      %585 = vmatpush.msra.mxu0 %v584
      %v586 = vand.u32 %v171, 4294901760
      %587 = vmatpush.msra.mxu0 %v586
      %v588 = vand.u32 %v170, 4294901760
      %589 = vmatpush.msra.mxu0 %v588
      %v590 = vand.u32 %v151, 4294901760
      %v591 = vsub.f32 %v151, %v590
      %v592 = vand.u32 %v591, 4294901760
      %v593 = vsub.f32 %v591, %v592
      %v594 = vand.u32 %v593, 4294901760
      %595 = vmatmul.f32.gmra.mxu0 %v594
      %v596 = vpop.f32.mrf.mxu0
      %v597 = vadd.f32 %v552, %v596
      %v598 = vand.u32 %v153, 4294901760
      %v599 = vsub.f32 %v153, %v598
      %v600 = vand.u32 %v599, 4294901760
      %v601 = vsub.f32 %v599, %v600
      %v602 = vand.u32 %v601, 4294901760
      %603 = vmatmul.f32.gmra.mxu0 %v602
      %v604 = vpop.f32.mrf.mxu0
      %v605 = vadd.f32 %v556, %v604
      %606 = vdwg.mxu0
      %v607 = vand.u32 %v185, 4294901760
      %v608 = vsub.f32 %v185, %v607
      %v609 = vand.u32 %v608, 4294901760
      %v610 = vsub.f32 %v608, %v609
      %v611 = vand.u32 %v610, 4294901760
      %612 = vmatpush.msra.mxu0 %v611
      %v613 = vand.u32 %v184, 4294901760
      %v614 = vsub.f32 %v184, %v613
      %v615 = vand.u32 %v614, 4294901760
      %v616 = vsub.f32 %v614, %v615
      %v617 = vand.u32 %v616, 4294901760
      %618 = vmatpush.msra.mxu0 %v617
      %v619 = vand.u32 %v183, 4294901760
      %v620 = vsub.f32 %v183, %v619
      %v621 = vand.u32 %v620, 4294901760
      %v622 = vsub.f32 %v620, %v621
      %v623 = vand.u32 %v622, 4294901760
      %624 = vmatpush.msra.mxu0 %v623
      %v625 = vand.u32 %v182, 4294901760
      %v626 = vsub.f32 %v182, %v625
      %v627 = vand.u32 %v626, 4294901760
      %v628 = vsub.f32 %v626, %v627
      %v629 = vand.u32 %v628, 4294901760
      %630 = vmatpush.msra.mxu0 %v629
      %v631 = vand.u32 %v181, 4294901760
      %v632 = vsub.f32 %v181, %v631
      %v633 = vand.u32 %v632, 4294901760
      %v634 = vsub.f32 %v632, %v633
      %v635 = vand.u32 %v634, 4294901760
      %636 = vmatpush.msra.mxu0 %v635
      %v637 = vand.u32 %v180, 4294901760
      %v638 = vsub.f32 %v180, %v637
      %v639 = vand.u32 %v638, 4294901760
      %v640 = vsub.f32 %v638, %v639
      %v641 = vand.u32 %v640, 4294901760
      %642 = vmatpush.msra.mxu0 %v641
      %v643 = vand.u32 %v179, 4294901760
      %v644 = vsub.f32 %v179, %v643
      %v645 = vand.u32 %v644, 4294901760
      %v646 = vsub.f32 %v644, %v645
      %v647 = vand.u32 %v646, 4294901760
      %648 = vmatpush.msra.mxu0 %v647
      %v649 = vand.u32 %v178, 4294901760
      %v650 = vsub.f32 %v178, %v649
      %v651 = vand.u32 %v650, 4294901760
      %v652 = vsub.f32 %v650, %v651
      %v653 = vand.u32 %v652, 4294901760
      %654 = vmatpush.msra.mxu0 %v653
      %v655 = vand.u32 %v177, 4294901760
      %v656 = vsub.f32 %v177, %v655
      %v657 = vand.u32 %v656, 4294901760
      %v658 = vsub.f32 %v656, %v657
      %v659 = vand.u32 %v658, 4294901760
      %660 = vmatpush.msra.mxu0 %v659
      %v661 = vand.u32 %v176, 4294901760
      %v662 = vsub.f32 %v176, %v661
      %v663 = vand.u32 %v662, 4294901760
      %v664 = vsub.f32 %v662, %v663
      %v665 = vand.u32 %v664, 4294901760
      %666 = vmatpush.msra.mxu0 %v665
      %v667 = vand.u32 %v175, 4294901760
      %v668 = vsub.f32 %v175, %v667
      %v669 = vand.u32 %v668, 4294901760
      %v670 = vsub.f32 %v668, %v669
      %v671 = vand.u32 %v670, 4294901760
      %672 = vmatpush.msra.mxu0 %v671
      %v673 = vand.u32 %v174, 4294901760
      %v674 = vsub.f32 %v174, %v673
      %v675 = vand.u32 %v674, 4294901760
      %v676 = vsub.f32 %v674, %v675
      %v677 = vand.u32 %v676, 4294901760
      %678 = vmatpush.msra.mxu0 %v677
      %v679 = vand.u32 %v173, 4294901760
      %v680 = vsub.f32 %v173, %v679
      %v681 = vand.u32 %v680, 4294901760
      %v682 = vsub.f32 %v680, %v681
      %v683 = vand.u32 %v682, 4294901760
      %684 = vmatpush.msra.mxu0 %v683
      %v685 = vand.u32 %v172, 4294901760
      %v686 = vsub.f32 %v172, %v685
      %v687 = vand.u32 %v686, 4294901760
      %v688 = vsub.f32 %v686, %v687
      %v689 = vand.u32 %v688, 4294901760
      %690 = vmatpush.msra.mxu0 %v689
      %v691 = vand.u32 %v171, 4294901760
      %v692 = vsub.f32 %v171, %v691
      %v693 = vand.u32 %v692, 4294901760
      %v694 = vsub.f32 %v692, %v693
      %v695 = vand.u32 %v694, 4294901760
      %696 = vmatpush.msra.mxu0 %v695
      %v697 = vand.u32 %v170, 4294901760
      %v698 = vsub.f32 %v170, %v697
      %v699 = vand.u32 %v698, 4294901760
      %v700 = vsub.f32 %v698, %v699
      %v701 = vand.u32 %v700, 4294901760
      %702 = vmatpush.msra.mxu0 %v701
      %v703 = vand.u32 %v151, 4294901760
      %704 = vmatmul.f32.gmra.mxu0 %v703
      %v705 = vpop.f32.mrf.mxu0
      %v706 = vadd.f32 %v597, %v705
      %v707 = vand.u32 %v153, 4294901760
      %708 = vmatmul.f32.gmra.mxu0 %v707
      %v709 = vpop.f32.mrf.mxu0
      %v710 = vadd.f32 %v605, %v709
      %711 = vdwg.mxu0
      %v712 = vand.u32 %v185, 4294901760
      %v713 = vsub.f32 %v185, %v712
      %714 = vmatpush.msra.mxu0 %v713
      %v715 = vand.u32 %v184, 4294901760
      %v716 = vsub.f32 %v184, %v715
      %717 = vmatpush.msra.mxu0 %v716
      %v718 = vand.u32 %v183, 4294901760
      %v719 = vsub.f32 %v183, %v718
      %720 = vmatpush.msra.mxu0 %v719
      %v721 = vand.u32 %v182, 4294901760
      %v722 = vsub.f32 %v182, %v721
      %723 = vmatpush.msra.mxu0 %v722
      %v724 = vand.u32 %v181, 4294901760
      %v725 = vsub.f32 %v181, %v724
      %726 = vmatpush.msra.mxu0 %v725
      %v727 = vand.u32 %v180, 4294901760
      %v728 = vsub.f32 %v180, %v727
      %729 = vmatpush.msra.mxu0 %v728
      %v730 = vand.u32 %v179, 4294901760
      %v731 = vsub.f32 %v179, %v730
      %732 = vmatpush.msra.mxu0 %v731
      %v733 = vand.u32 %v178, 4294901760
      %v734 = vsub.f32 %v178, %v733
      %735 = vmatpush.msra.mxu0 %v734
      %v736 = vand.u32 %v177, 4294901760
      %v737 = vsub.f32 %v177, %v736
      %738 = vmatpush.msra.mxu0 %v737
      %v739 = vand.u32 %v176, 4294901760
      %v740 = vsub.f32 %v176, %v739
      %741 = vmatpush.msra.mxu0 %v740
      %v742 = vand.u32 %v175, 4294901760
      %v743 = vsub.f32 %v175, %v742
      %744 = vmatpush.msra.mxu0 %v743
      %v745 = vand.u32 %v174, 4294901760
      %v746 = vsub.f32 %v174, %v745
      %747 = vmatpush.msra.mxu0 %v746
      %v748 = vand.u32 %v173, 4294901760
      %v749 = vsub.f32 %v173, %v748
      %750 = vmatpush.msra.mxu0 %v749
      %v751 = vand.u32 %v172, 4294901760
      %v752 = vsub.f32 %v172, %v751
      %753 = vmatpush.msra.mxu0 %v752
      %v754 = vand.u32 %v171, 4294901760
      %v755 = vsub.f32 %v171, %v754
      %756 = vmatpush.msra.mxu0 %v755
      %v757 = vand.u32 %v170, 4294901760
      %v758 = vsub.f32 %v170, %v757
      %759 = vmatpush.msra.mxu0 %v758
      %v760 = vand.u32 %v151, 4294901760
      %v761 = vsub.f32 %v151, %v760
      %762 = vmatmul.f32.gmra.mxu0 %v761
      %v763 = vpop.f32.mrf.mxu0
      %v764 = vadd.f32 %v706, %v763
      %v765 = vand.u32 %v153, 4294901760
      %v766 = vsub.f32 %v153, %v765
      %767 = vmatmul.f32.gmra.mxu0 %v766
      %v768 = vpop.f32.mrf.mxu0
      %v769 = vadd.f32 %v710, %v768
      %770 = vdwg.mxu0
      %v771 = vand.u32 %v185, 4294901760
      %772 = vmatpush.msra.mxu0 %v771
      %v773 = vand.u32 %v184, 4294901760
      %774 = vmatpush.msra.mxu0 %v773
      %v775 = vand.u32 %v183, 4294901760
      %776 = vmatpush.msra.mxu0 %v775
      %v777 = vand.u32 %v182, 4294901760
      %778 = vmatpush.msra.mxu0 %v777
      %v779 = vand.u32 %v181, 4294901760
      %780 = vmatpush.msra.mxu0 %v779
      %v781 = vand.u32 %v180, 4294901760
      %782 = vmatpush.msra.mxu0 %v781
      %v783 = vand.u32 %v179, 4294901760
      %784 = vmatpush.msra.mxu0 %v783
      %v785 = vand.u32 %v178, 4294901760
      %786 = vmatpush.msra.mxu0 %v785
      %v787 = vand.u32 %v177, 4294901760
      %788 = vmatpush.msra.mxu0 %v787
      %v789 = vand.u32 %v176, 4294901760
      %790 = vmatpush.msra.mxu0 %v789
      %v791 = vand.u32 %v175, 4294901760
      %792 = vmatpush.msra.mxu0 %v791
      %v793 = vand.u32 %v174, 4294901760
      %794 = vmatpush.msra.mxu0 %v793
      %v795 = vand.u32 %v173, 4294901760
      %796 = vmatpush.msra.mxu0 %v795
      %v797 = vand.u32 %v172, 4294901760
      %798 = vmatpush.msra.mxu0 %v797
      %v799 = vand.u32 %v171, 4294901760
      %800 = vmatpush.msra.mxu0 %v799
      %v801 = vand.u32 %v170, 4294901760
      %802 = vmatpush.msra.mxu0 %v801
      %v803 = vand.u32 %v151, 4294901760
      %v804 = vsub.f32 %v151, %v803
      %v805 = vand.u32 %v804, 4294901760
      %806 = vmatmul.f32.gmra.mxu0 %v805
      %v807 = vpop.f32.mrf.mxu0
      %v808 = vadd.f32 %v764, %v807
      %v809 = vand.u32 %v153, 4294901760
      %v810 = vsub.f32 %v153, %v809
      %v811 = vand.u32 %v810, 4294901760
      %812 = vmatmul.f32.gmra.mxu0 %v811
      %v813 = vpop.f32.mrf.mxu0
      %v814 = vadd.f32 %v769, %v813
      %815 = vdwg.mxu0
      %v816 = vand.u32 %v185, 4294901760
      %v817 = vsub.f32 %v185, %v816
      %v818 = vand.u32 %v817, 4294901760
      %819 = vmatpush.msra.mxu0 %v818
      %v820 = vand.u32 %v184, 4294901760
      %v821 = vsub.f32 %v184, %v820
      %v822 = vand.u32 %v821, 4294901760
      %823 = vmatpush.msra.mxu0 %v822
      %v824 = vand.u32 %v183, 4294901760
      %v825 = vsub.f32 %v183, %v824
      %v826 = vand.u32 %v825, 4294901760
      %827 = vmatpush.msra.mxu0 %v826
      %v828 = vand.u32 %v182, 4294901760
      %v829 = vsub.f32 %v182, %v828
      %v830 = vand.u32 %v829, 4294901760
      %831 = vmatpush.msra.mxu0 %v830
      %v832 = vand.u32 %v181, 4294901760
      %v833 = vsub.f32 %v181, %v832
      %v834 = vand.u32 %v833, 4294901760
      %835 = vmatpush.msra.mxu0 %v834
      %v836 = vand.u32 %v180, 4294901760
      %v837 = vsub.f32 %v180, %v836
      %v838 = vand.u32 %v837, 4294901760
      %839 = vmatpush.msra.mxu0 %v838
      %v840 = vand.u32 %v179, 4294901760
      %v841 = vsub.f32 %v179, %v840
      %v842 = vand.u32 %v841, 4294901760
      %843 = vmatpush.msra.mxu0 %v842
      %v844 = vand.u32 %v178, 4294901760
      %v845 = vsub.f32 %v178, %v844
      %v846 = vand.u32 %v845, 4294901760
      %847 = vmatpush.msra.mxu0 %v846
      %v848 = vand.u32 %v177, 4294901760
      %v849 = vsub.f32 %v177, %v848
      %v850 = vand.u32 %v849, 4294901760
      %851 = vmatpush.msra.mxu0 %v850
      %v852 = vand.u32 %v176, 4294901760
      %v853 = vsub.f32 %v176, %v852
      %v854 = vand.u32 %v853, 4294901760
      %855 = vmatpush.msra.mxu0 %v854
      %v856 = vand.u32 %v175, 4294901760
      %v857 = vsub.f32 %v175, %v856
      %v858 = vand.u32 %v857, 4294901760
      %859 = vmatpush.msra.mxu0 %v858
      %v860 = vand.u32 %v174, 4294901760
      %v861 = vsub.f32 %v174, %v860
      %v862 = vand.u32 %v861, 4294901760
      %863 = vmatpush.msra.mxu0 %v862
      %v864 = vand.u32 %v173, 4294901760
      %v865 = vsub.f32 %v173, %v864
      %v866 = vand.u32 %v865, 4294901760
      %867 = vmatpush.msra.mxu0 %v866
      %v868 = vand.u32 %v172, 4294901760
      %v869 = vsub.f32 %v172, %v868
      %v870 = vand.u32 %v869, 4294901760
      %871 = vmatpush.msra.mxu0 %v870
      %v872 = vand.u32 %v171, 4294901760
      %v873 = vsub.f32 %v171, %v872
      %v874 = vand.u32 %v873, 4294901760
      %875 = vmatpush.msra.mxu0 %v874
      %v876 = vand.u32 %v170, 4294901760
      %v877 = vsub.f32 %v170, %v876
      %v878 = vand.u32 %v877, 4294901760
      %879 = vmatpush.msra.mxu0 %v878
      %v880 = vand.u32 %v151, 4294901760
      %881 = vmatmul.f32.gmra.mxu0 %v880
      %v882 = vpop.f32.mrf.mxu0
      %v883 = vadd.f32 %v808, %v882
      %v884 = vand.u32 %v153, 4294901760
      %885 = vmatmul.f32.gmra.mxu0 %v884
      %v886 = vpop.f32.mrf.mxu0
      %v887 = vadd.f32 %v814, %v886
      %888 = vdwg.mxu0
      %v889 = vand.u32 %v185, 4294901760
      %890 = vmatpush.msra.mxu0 %v889
      %v891 = vand.u32 %v184, 4294901760
      %892 = vmatpush.msra.mxu0 %v891
      %v893 = vand.u32 %v183, 4294901760
      %894 = vmatpush.msra.mxu0 %v893
      %v895 = vand.u32 %v182, 4294901760
      %896 = vmatpush.msra.mxu0 %v895
      %v897 = vand.u32 %v181, 4294901760
      %898 = vmatpush.msra.mxu0 %v897
      %v899 = vand.u32 %v180, 4294901760
      %900 = vmatpush.msra.mxu0 %v899
      %v901 = vand.u32 %v179, 4294901760
      %902 = vmatpush.msra.mxu0 %v901
      %v903 = vand.u32 %v178, 4294901760
      %904 = vmatpush.msra.mxu0 %v903
      %v905 = vand.u32 %v177, 4294901760
      %906 = vmatpush.msra.mxu0 %v905
      %v907 = vand.u32 %v176, 4294901760
      %908 = vmatpush.msra.mxu0 %v907
      %v909 = vand.u32 %v175, 4294901760
      %910 = vmatpush.msra.mxu0 %v909
      %v911 = vand.u32 %v174, 4294901760
      %912 = vmatpush.msra.mxu0 %v911
      %v913 = vand.u32 %v173, 4294901760
      %914 = vmatpush.msra.mxu0 %v913
      %v915 = vand.u32 %v172, 4294901760
      %916 = vmatpush.msra.mxu0 %v915
      %v917 = vand.u32 %v171, 4294901760
      %918 = vmatpush.msra.mxu0 %v917
      %v919 = vand.u32 %v170, 4294901760
      %920 = vmatpush.msra.mxu0 %v919
      %v921 = vand.u32 %v151, 4294901760
      %922 = vmatmul.f32.gmra.mxu0 %v921
      %v923 = vpop.f32.mrf.mxu0
      %v924 = vadd.f32 %v883, %v923
      %v925 = vand.u32 %v153, 4294901760
      %926 = vmatmul.f32.gmra.mxu0 %v925
      %v927 = vpop.f32.mrf.mxu0
      %v928 = vadd.f32 %v887, %v927
      %929 = vdwg.mxu0
      %vm930 = vcmask 523264
      %931 = vst.msk [vmem:[#allocation2] sm:$0xff] %vm930, %v924
      %932 = vst.msk [vmem:[#allocation2 + $0x8] sm:$0xff] %vm930, %v928
      %933 = vst.msk [vmem:[%s148] sm:$0xff] %vm930, 0.0
      %934 = vst.msk [vmem:[%s148 + $0x18] sm:$0xff] %vm930, 0.0
      %v935 = vld [vmem:[#allocation2] sm:$0xff]
      %v936 = vld [vmem:[#allocation2 + $0x8] sm:$0xff]
      %937 = vst.msk [vmem:[%s148 + $0x8] sm:$0xff] %vm930, %v935
      %938 = vst.msk [vmem:[%s148 + $0x10] sm:$0xff] %vm930, %v936
      %s939 = smul.u32 4, %s13
      %p940 = scmp.lt.s32.totalorder %s939, 7
      %s941 = scalar_select %p940, %s939, 7
      %s942 = smul.addr %s941, 8
      %s943 = scalar_lea.vmem %s2, %s942
      // Predicated region
      $region29: #{lambda_layer_shortcut.1} parent=27 // pred_check
        %p944 = pneg %p78
      $region30: #{lambda_layer_shortcut.1} parent=27 // pred_check_branch
        %946 = sbr.rel (%p944) target = $region32
      $region31: #{lambda_layer_shortcut.1} parent=27 // pred_region
        %s947 = smul.u32 4, %s13
      $region32: #{lambda_layer_shortcut.1} parent=27 // pred_fallthru
        _
    $region28: #{lambda_layer_shortcut.1} parent=5 // pred_fallthru
      _
    %p948 = scmp.le.s32.totalorder 2, %s8
    // Predicated region
    $region33: #{lambda_layer_shortcut.1} parent=5 // pred_check
      %p949 = pneg %p948
    $region34: #{lambda_layer_shortcut.1} parent=5 // pred_check_branch
      %951 = sbr.rel (%p949) target = $region36
    $region35: #{lambda_layer_shortcut.1} parent=5 // pred_region
      %s952 = ssub.s32 %s8, 2
      // Predicated region
      $region37: #{lambda_layer_shortcut.1} parent=35 // pred_check
        %p953 = pneg %p84
      $region38: #{lambda_layer_shortcut.1} parent=35 // pred_check_branch
        %955 = sbr.rel (%p953) target = $region40
      $region39: #{lambda_layer_shortcut.1} parent=35 // pred_region
        %s956 = smul.u32 4, %s14
        %p957 = scmp.lt.s32.totalorder %s956, 7
        %s958 = scalar_select %p957, %s956, 7
        %s959 = smul.addr %s958, 8
        %s960 = scalar_lea.vmem %s2, %s959
      $region40: #{lambda_layer_shortcut.1} parent=35 // pred_fallthru
        _
    $region36: #{lambda_layer_shortcut.1} parent=5 // pred_fallthru
      _
  $region6: #{lambda_layer_shortcut.1} parent=0 // loop_footer
    %s12 = sadd.s32 1, %s8
  $region7: #{lambda_layer_shortcut.1} parent=0 // loop_footer_branch
    %7 = sbr.rel target = $region3
  $region8: #{lambda_layer_shortcut.1} parent=0 // loop_exit
    _

</llo_original>
